<compile_context>
chip_gen: v6e
topology: v6e:2x2x1
jax: 0.10.0
libtpu: 0.0.40
codegen_flags: <defaults>
</compile_context>

<pallas_src>
import functools

import jax
import jax.numpy as jnp
from jax.experimental import pallas as pl
from jax.experimental.pallas import tpu as pltpu


def _round_up(v, m):
    return (v + m - 1) // m * m


def _focal_loss_kernel(x_ref, t_ref, out_ref, *, gamma, n_total, tile_n):
    """One (TN, C) logits tile -> one lane-dense (1, 128) partial-sum block."""
    x = x_ref[...].astype(jnp.float32)                # (TN, C); all math in f32
    # Targets arrive lane-dense as (1, TN); one cheap XLU relayout to (TN, 1).
    t = jnp.transpose(t_ref[...])                     # (TN, 1) int32

    # Numerically stable softmax pieces; xs is reused by both the exp and the
    # target gather, so logp = log(sum_exp) - (x_t - m).
    m = jnp.max(x, axis=-1, keepdims=True)            # (TN, 1)
    xs = x - m                                        # (TN, C)
    s = jnp.sum(jnp.exp(xs), axis=-1, keepdims=True)  # (TN, 1)

    # Gather x[r, t[r]] - m[r] via select + reduce. The column iota is a single
    # (1, C) row broadcast against t, not a full (TN, C) iota per grid step.
    col = jax.lax.broadcasted_iota(jnp.int32, (1, x.shape[-1]), 1)
    x_t_m = jnp.sum(jnp.where(col == t, xs, 0.0), axis=-1, keepdims=True)

    logp = jnp.log(s) - x_t_m                         # per-row cross entropy
    p = jnp.exp(-logp)
    one_minus_p = 1.0 - p

    g = float(gamma)
    if g == 2.0:
        focal = jnp.square(one_minus_p)               # one VPU mul
    elif g.is_integer():
        focal = jax.lax.integer_pow(one_minus_p, int(g))
    else:
        # p can exceed 1 by an ulp; clamp so power(negative, non-integer) != NaN.
        focal = jnp.power(jnp.maximum(one_minus_p, 0.0), g)
    loss = focal * logp                               # (TN, 1)

    # Mask rows past the true N (ragged last tile / OOB-padded block rows);
    # select, not multiply, so garbage rows cannot leak Inf/NaN into the sum.
    base = pl.program_id(0) * tile_n
    row = base + jax.lax.broadcasted_iota(jnp.int32, (tile_n, 1), 0)
    loss = jnp.where(row < n_total, loss, 0.0)

    tile_sum = jnp.sum(loss)
    # Lane-dense partial-sum block: value in lane 0, zeros elsewhere.
    lane = jax.lax.broadcasted_iota(jnp.int32, (1, 128), 1)
    out_ref[...] = jnp.where(lane == 0, tile_sum, 0.0)


def _tile_plan(n, c, itemsize, max_rows_per_tile=None):
    """Pick (tile_rows, vmem_limit_bytes) from the device generation."""
    kind = ""
    try:
        kind = jax.devices()[0].device_kind.lower()
    except Exception:
        pass
    if "v7" in kind:
        # v7x: only 64 MiB physical VMEM per TC, and the in-kernel f32
        # temporaries add ~1-2x tile size on top of the double-buffered inputs.
        working_budget = 24 * 1024 * 1024
        vmem_limit = 48 * 1024 * 1024
    else:
        # v5e / v6e: 128 MiB physical VMEM; don't design for the 16 MiB default.
        working_budget = 64 * 1024 * 1024
        vmem_limit = 100 * 1024 * 1024

    # Rough per-row working set: double-buffered input tile + f32 cast / exp
    # temporaries + a handful of lane-padded (TN, 1) per-row intermediates.
    per_row = 2 * c * itemsize + 3 * c * 4 + 6 * 128 * 4
    tn = max(1, working_budget // per_row)

    row_align = 128  # keeps multi-tile blocks legal for logits (sublane) and
                     # lane-dense targets (lane) on every dtype
    sublane = {1: 32, 2: 16}.get(itemsize, 8)

    if n >= 2 * row_align:
        # Multi-tile path: always >=2 grid steps so the "parallel" axis can be
        # sharded across v7x's two TensorCores.
        tn = min(tn, _round_up(-(-n // 2), row_align))
        tn = max(row_align, tn // row_align * row_align)
        if max_rows_per_tile is not None:
            tn = min(tn, max(row_align,
                             max_rows_per_tile // row_align * row_align))
    else:
        # Everything fits in one tile; round rows to the dtype sublane multiple.
        tn = _round_up(n, sublane)
    return tn, vmem_limit


def focal_loss(x, t, gamma=2.0, max_rows_per_tile=None):
    """x: (N, C) logits (f32 or bf16), t: (N,) int class indices -> scalar f32."""
    n, c = x.shape
    itemsize = jnp.dtype(x.dtype).itemsize
    tn, vmem_limit = _tile_plan(n, c, itemsize, max_rows_per_tile)
    num_tiles = pl.cdiv(n, tn)
    n_pad = num_tiles * tn

    # Targets go in lane-dense as (1, n_pad): one contiguous DMA per tile and
    # no 128x lane-padded (N, 1) column in VMEM. Padded tail is masked in-kernel.
    t2 = jnp.pad(t.astype(jnp.int32), (0, n_pad - n)).reshape(1, n_pad)

    kernel = functools.partial(
        _focal_loss_kernel, gamma=float(gamma), n_total=n, tile_n=tn)

    cost = pl.CostEstimate(
        flops=7 * n * c,
        transcendentals=n * c + 2 * n,
        bytes_accessed=n * c * itemsize + n_pad * 4 + num_tiles * 128 * 4,
    )

    partials = pl.pallas_call(
        kernel,
        out_shape=jax.ShapeDtypeStruct((1, num_tiles * 128), jnp.float32),
        grid=(num_tiles,),
        in_specs=[
            pl.BlockSpec((tn, c), lambda i: (i, 0)),   # logits tile (native dtype)
            pl.BlockSpec((1, tn), lambda i: (0, i)),   # lane-dense target ids
        ],
        out_specs=pl.BlockSpec((1, 128), lambda i: (0, i)),
        compiler_params=pltpu.CompilerParams(
            dimension_semantics=("parallel",),
            vmem_limit_bytes=vmem_limit),
        cost_estimate=cost,
    )(x, t2)

    return jnp.sum(partials) / n


def _focal_loss_ref(x, t, gamma=2.0):
    # Pure-JAX reference for verification.
    x = x.astype(jnp.float32)
    lse = jax.scipy.special.logsumexp(x, axis=-1)
    x_t = jnp.take_along_axis(x, t[:, None], axis=-1)[:, 0]
    logp = lse - x_t
    p = jnp.exp(-logp)
    return jnp.mean((1.0 - p) ** gamma * logp)


if __name__ == "__main__":
    key = jax.random.PRNGKey(0)
    kx, kt = jax.random.split(key)

    # Small shapes consistent with the module: (N, C) logits + class targets.
    N, C = 8, 32
    x = jax.random.normal(kx, (N, C), dtype=jnp.float32)
    t = jax.random.randint(kt, (N,), 0, C, dtype=jnp.int32)

    loss = jax.block_until_ready(focal_loss(x, t, gamma=2.0))
    ref = jax.block_until_ready(_focal_loss_ref(x, t, gamma=2.0))
    assert jnp.allclose(loss, ref, rtol=1e-5, atol=1e-6), (loss, ref)

    # Multi-tile + ragged-N path with default sizing (exercises the grid,
    # megacore-friendly >=2 tiles, row masking, partial last tile).
    N2, C2 = 300, 160
    kx2, kt2 = jax.random.split(jax.random.PRNGKey(1))
    x2 = jax.random.normal(kx2, (N2, C2), dtype=jnp.float32)
    t2 = jax.random.randint(kt2, (N2,), 0, C2, dtype=jnp.int32)
    loss2 = jax.block_until_ready(focal_loss(x2, t2, gamma=2.0))
    ref2 = jax.block_until_ready(_focal_loss_ref(x2, t2, gamma=2.0))
    assert jnp.allclose(loss2, ref2, rtol=1e-5, atol=1e-6), (loss2, ref2)

    # bf16 ingest path with a forced small tile (3 grid steps): half the HBM
    # bytes, math still f32 in-kernel.
    x2b = x2.astype(jnp.bfloat16)
    loss2b = jax.block_until_ready(
        focal_loss(x2b, t2, gamma=2.0, max_rows_per_tile=128))
    ref2b = jax.block_until_ready(_focal_loss_ref(x2b, t2, gamma=2.0))
    assert jnp.allclose(loss2b, ref2b, rtol=1e-4, atol=1e-5), (loss2b, ref2b)

    print("KERNEL_OK")
</pallas_src>

<mosaic_0001>
module attributes {stable_mosaic.version = 11 : i64} {
  func.func @_focal_loss_kernel(%arg0: i32, %arg1: memref<8x32xf32, #tpu.memory_space<vmem>>, %arg2: memref<1x8xi32, #tpu.memory_space<vmem>>, %arg3: memref<1x128xf32, #tpu.memory_space<vmem>>) attributes {dimension_semantics = [#tpu.dimension_semantics<parallel>], iteration_bounds = array<i64: 1>, scalar_prefetch = 0 : i64, scratch_operands = 0 : i64, tpu.core_type = #tpu.core_type<tc>, window_params = [{transform_indices = @transform_0, window_bounds = array<i64: 8, 32>}, {transform_indices = @transform_1, window_bounds = array<i64: 1, 8>}, {transform_indices = @transform_2, window_bounds = array<i64: 1, 128>}]} {
    %c0 = arith.constant 0 : index
    %c0_0 = arith.constant 0 : index
    %0 = vector.load %arg1[%c0, %c0_0] : memref<8x32xf32, #tpu.memory_space<vmem>>, vector<8x32xf32>
    %c0_1 = arith.constant 0 : index
    %c0_2 = arith.constant 0 : index
    %1 = vector.load %arg2[%c0_1, %c0_2] : memref<1x8xi32, #tpu.memory_space<vmem>>, vector<1x8xi32>
    %2 = tpu.transpose %1, [1, 0] : vector<1x8xi32> -> vector<8x1xi32>
    %cst = arith.constant dense<0xFF800000> : vector<8xf32>
    %3 = vector.multi_reduction <maximumf>, %0, %cst [1] : vector<8x32xf32> to vector<8xf32>
    %4 = vector.shape_cast %3 : vector<8xf32> to vector<8x1xf32>
    %5 = vector.broadcast %4 : vector<8x1xf32> to vector<8x32xf32>
    %6 = arith.subf %0, %5 : vector<8x32xf32>
    %7 = math.exp %6 : vector<8x32xf32>
    %cst_3 = arith.constant dense<0.000000e+00> : vector<8xf32>
    %8 = vector.multi_reduction <add>, %7, %cst_3 [1] : vector<8x32xf32> to vector<8xf32>
    %9 = vector.shape_cast %8 : vector<8xf32> to vector<8x1xf32>
    %10 = tpu.iota {dimensions = array<i32: 1>} : vector<1x32xi32>
    %11 = vector.broadcast %10 : vector<1x32xi32> to vector<8x32xi32>
    %12 = vector.broadcast %2 : vector<8x1xi32> to vector<8x32xi32>
    %13 = arith.cmpi eq, %11, %12 : vector<8x32xi32>
    %cst_4 = arith.constant 0.000000e+00 : f32
    %14 = vector.broadcast %cst_4 : f32 to vector<8x32xf32>
    %15 = arith.select %13, %6, %14 : vector<8x32xi1>, vector<8x32xf32>
    %cst_5 = arith.constant dense<0.000000e+00> : vector<8xf32>
    %16 = vector.multi_reduction <add>, %15, %cst_5 [1] : vector<8x32xf32> to vector<8xf32>
    %17 = vector.shape_cast %16 : vector<8xf32> to vector<8x1xf32>
    %18 = math.log %9 : vector<8x1xf32>
    %19 = arith.subf %18, %17 : vector<8x1xf32>
    %cst_6 = arith.constant 0.000000e+00 : f32
    %20 = vector.broadcast %cst_6 : f32 to vector<8x1xf32>
    %21 = arith.subf %20, %19 : vector<8x1xf32>
    %22 = math.exp %21 : vector<8x1xf32>
    %cst_7 = arith.constant 1.000000e+00 : f32
    %23 = vector.broadcast %cst_7 : f32 to vector<8x1xf32>
    %24 = arith.subf %23, %22 : vector<8x1xf32>
    %25 = arith.mulf %24, %24 : vector<8x1xf32>
    %26 = arith.mulf %25, %19 : vector<8x1xf32>
    %c8_i32 = arith.constant 8 : i32
    %27 = arith.muli %arg0, %c8_i32 : i32
    %28 = tpu.iota {dimensions = array<i32: 0>} : vector<8x1xi32>
    %29 = vector.broadcast %27 : i32 to vector<8x1xi32>
    %30 = arith.addi %29, %28 : vector<8x1xi32>
    %c8_i32_8 = arith.constant 8 : i32
    %31 = vector.broadcast %c8_i32_8 : i32 to vector<8x1xi32>
    %32 = arith.cmpi slt, %30, %31 : vector<8x1xi32>
    %cst_9 = arith.constant 0.000000e+00 : f32
    %33 = vector.broadcast %cst_9 : f32 to vector<8x1xf32>
    %34 = arith.select %32, %26, %33 : vector<8x1xi1>, vector<8x1xf32>
    %35 = vector.shape_cast %34 : vector<8x1xf32> to vector<1x8x1xf32>
    %cst_10 = arith.constant dense<0.000000e+00> : vector<1xf32>
    %36 = vector.multi_reduction <add>, %35, %cst_10 [1, 2] : vector<1x8x1xf32> to vector<1xf32>
    %37 = vector.shape_cast %36 : vector<1xf32> to vector<1x1x1xf32>
    %38 = vector.extract %37[0, 0, 0] : f32 from vector<1x1x1xf32>
    %39 = tpu.iota {dimensions = array<i32: 1>} : vector<1x128xi32>
    %c0_i32 = arith.constant 0 : i32
    %40 = vector.broadcast %c0_i32 : i32 to vector<1x128xi32>
    %41 = arith.cmpi eq, %39, %40 : vector<1x128xi32>
    %cst_11 = arith.constant 0.000000e+00 : f32
    %42 = vector.broadcast %38 : f32 to vector<1x128xf32>
    %43 = vector.broadcast %cst_11 : f32 to vector<1x128xf32>
    %44 = arith.select %41, %42, %43 : vector<1x128xi1>, vector<1x128xf32>
    %c0_12 = arith.constant 0 : index
    %c0_13 = arith.constant 0 : index
    %45 = vector.load %arg3[%c0_12, %c0_13] : memref<1x128xf32, #tpu.memory_space<vmem>>, vector<1x128xf32>
    tpu.vector_store %arg3[%c0_12, %c0_13], %44 {strides = array<i32>} : memref<1x128xf32, #tpu.memory_space<vmem>>, vector<1x128xf32>,
    return
  }
  func.func @transform_0(%arg0: i32) -> (i32, i32) {
    %c0_i32 = arith.constant 0 : i32
    %c0_i32_0 = arith.constant 0 : i32
    return %arg0, %c0_i32 : i32, i32
  }
  func.func @transform_1(%arg0: i32) -> (i32, i32) {
    %c0_i32 = arith.constant 0 : i32
    %c0_i32_0 = arith.constant 0 : i32
    return %c0_i32, %arg0 : i32, i32
  }
  func.func @transform_2(%arg0: i32) -> (i32, i32) {
    %c0_i32 = arith.constant 0 : i32
    %c0_i32_0 = arith.constant 0 : i32
    return %c0_i32, %arg0 : i32, i32
  }
}

</mosaic_0001>

<llo_original>
// kernel: tpu_custom_call.1
$region0: #{tpu_custom_call.1}
  #allocation0 [shape = 'u32[]', space=smem, size = 0x4, offset = 0x4, fixed_abs, tag = 'smem constant byte address 0x4 - core index']
  #allocation1 [shape = 'u32[144,128]{1,0:T(1,128)}', space=vmem, size = 0x12000, scoped, tag = 'internal scratch']
  %s0 = inlined_call_operand.hbm [shape: f32[8,32], index: 0, kind: input, shape index: {}]
  %s1 = inlined_call_operand.vmem [shape: s32[1,8], index: 1, kind: input, shape index: {}]
  %s2 = inlined_call_operand.hbm [shape: f32[1,128], index: 2, kind: output, shape index: {}]
  %s3 = sld [smem:[#allocation0]]
  $region22: #{tpu_custom_call.1} parent=0
    _
  %s5 = ssub.s32 1, %s3
  %s6 = scalar_select 0, %s5, %s3
  $region1: #{tpu_custom_call.1} parent=0
    #allocation2 [shape = 'u8[4096]{0}', space=vmem, size = 0x1000, scoped, tag = 'input window, operand 0, single buffered']
    #allocation3 [shape = 's32[1]{0}', space=sflag, size = 0x4, scoped, tag = 'scoped memory for tpu_custom_call.1']
    #allocation4 [shape = 's32[1]{0}', space=sflag, size = 0x4, scoped, tag = 'scoped memory for tpu_custom_call.1']
    #allocation5 [shape = 'u8[512]{0}', space=vmem, size = 0x400, scoped, tag = 'output window, operand 0, single buffered']
    %7 = vsyncpa [#allocation3], 0
    %8 = vsyncpa [#allocation4], 0
    // Predicated region
    $region2: #{tpu_custom_call.1} parent=1 // pred_check
      _
    $region3: #{tpu_custom_call.1} parent=1 // pred_check_branch
      %10 = sbr.rel (0) target = $region5
    $region4: #{tpu_custom_call.1} parent=1 // pred_region
      %s12 = ssub.s32 128, 128
      %13 = vsyncadd [#allocation3], %s12
      %s15 = sshll.u32 [#allocation2], 4
      %s16 = int_to_ptr.vmem [resolvable:$true] %s15
      %18 = dma.hbm_to_vmem [thread:$0]  %s0, 128, %s16, [#allocation3]
    $region5: #{tpu_custom_call.1} parent=1 // pred_fallthru
      _
    // Predicated region
    $region6: #{tpu_custom_call.1} parent=1 // pred_check
      _
    $region7: #{tpu_custom_call.1} parent=1 // pred_check_branch
      %20 = sbr.rel (0) target = $region9
    $region8: #{tpu_custom_call.1} parent=1 // pred_region
      _
    $region9: #{tpu_custom_call.1} parent=1 // pred_fallthru
      _
    // Predicated region
    $region10: #{tpu_custom_call.1} parent=1 // pred_check
      _
    $region11: #{tpu_custom_call.1} parent=1 // pred_check_branch
      %22 = sbr.rel (0) target = $region13
    $region12: #{tpu_custom_call.1} parent=1 // pred_region
      %23 = dma.done [#allocation3], 128
    $region13: #{tpu_custom_call.1} parent=1 // pred_fallthru
      _
    %v24 = vld [vmem:[#allocation2] sm:$0xff]
    %v25 = vld [vmem:[%s1] sm:$0x1]
    %26 = vxpose.xlu0.b32.start [1/16] %v25, 128
    %27 = vxpose.xlu0.b32.cont [2/16] 0, 128
    %28 = vxpose.xlu0.b32.cont [3/16] 0, 128
    %29 = vxpose.xlu0.b32.cont [4/16] 0, 128
    %30 = vxpose.xlu0.b32.cont [5/16] 0, 128
    %31 = vxpose.xlu0.b32.cont [6/16] 0, 128
    %32 = vxpose.xlu0.b32.cont [7/16] 0, 128
    %33 = vxpose.xlu0.b32.cont [8/16] 0, 128
    %34 = vxpose.xlu0.b32.cont [9/16] 0, 128
    %35 = vxpose.xlu0.b32.cont [10/16] 0, 128
    %36 = vxpose.xlu0.b32.cont [11/16] 0, 128
    %37 = vxpose.xlu0.b32.cont [12/16] 0, 128
    %38 = vxpose.xlu0.b32.cont [13/16] 0, 128
    %39 = vxpose.xlu0.b32.cont [14/16] 0, 128
    %40 = vxpose.xlu0.b32.cont [15/16] 0, 128
    %41 = vxpose.xlu0.b32.end [16/16] 0, 128
    %v42 = vpop.trf.xlu0
    %v43 = vpop.trf.xlu0
    %v44 = vpop.trf.xlu0
    %v45 = vpop.trf.xlu0
    %v46 = vpop.trf.xlu0
    %v47 = vpop.trf.xlu0
    %v48 = vpop.trf.xlu0
    %v49 = vpop.trf.xlu0
    %v50 = vpop.trf.xlu0
    %v51 = vpop.trf.xlu0
    %v52 = vpop.trf.xlu0
    %v53 = vpop.trf.xlu0
    %v54 = vpop.trf.xlu0
    %v55 = vpop.trf.xlu0
    %v56 = vpop.trf.xlu0
    %v57 = vpop.trf.xlu0
    %vm58 = vcmask 261120
    %v59 = vsel %vm58, %v24, -inf
    %60 = vmax.xlane.f32.xlu0 %v59
    %v61 = vpop.xlane.xlu0 %60
    %v62 = vsub.f32 %v24, %v61
    %v63 = vmul.f32 %v62, 1.442695
    %v64 = vpow.pop %v63
    %v65 = vsel %vm58, %v64, 0.0
    %66 = vadd.xlane.f32.xlu0 %v65
    %v67 = vpop.xlane.xlu0 %66
    %v68 = vlaneseq
    %v69 = vand.u32 %v68, 127
    %70 = vset.pattern.permute.xlu0 0
    %71 = vperm.xlu0 %70, %v42
    %v72 = vpop.permute.xlu0 %71
    %vm73 = vcmp.eq.s32.totalorder %v69, %v72
    %v74 = vsel %vm73, %v62, 0.0
    %v75 = vsel %vm58, %v74, 0.0
    %76 = vadd.xlane.f32.xlu0 %v75
    %v77 = vpop.xlane.xlu0 %76
    %v78 = vlog2.pop %v67
    %v79 = vmul.f32 %v78, 0.6931472
    %v80 = vsub.f32 %v79, %v77
    %v81 = vsub.f32 0.0, %v80
    %v82 = vmul.f32 %v81, 1.442695
    %v83 = vpow.pop %v82
    %v84 = vsub.f32 1.0, %v83
    %v85 = vmul.f32 %v84, %v84
    %v86 = vmul.f32 %v85, %v80
    %s87 = smul.u32 0, 8
    %v88 = vlaneseq
    %v89 = vshrl.u32 %v88, 7
    %v90 = vstv %s87
    %v91 = vadd.s32 %v90, %v89
    %vm92 = vcmp.lt.s32.totalorder %v91, 8
    %v93 = vsel %vm92, %v86, 0.0
    %vm94 = vcmask 7168
    %v95 = vsel %vm94, %v93, 0.0
    %96 = vadd.xlane.f32.xlu0 %v95
    %v97 = vpop.xlane.xlu0 %96
    %v98 = vrot.slane %v97, 4
    %v99 = vadd.f32 %v97, %v98
    %v100 = vrot.slane %v99, 2
    %v101 = vadd.f32 %v99, %v100
    %v102 = vrot.slane %v101, 1
    %v103 = vadd.f32 %v101, %v102
    %s104 = vtos %v103
    %vm105 = vcmp.eq.s32.totalorder %v69, 0
    %v106 = vstv %s104
    %v107 = vsel %vm105, %v106, 0.0
    %108 = vst [vmem:[#allocation5] sm:$0x1] %v107
    // Predicated region
    $region14: #{tpu_custom_call.1} parent=1 // pred_check
      _
    $region15: #{tpu_custom_call.1} parent=1 // pred_check_branch
      %110 = sbr.rel (0) target = $region17
    $region16: #{tpu_custom_call.1} parent=1 // pred_region
      %s112 = ssub.s32 16, 16
      %113 = vsyncadd [#allocation4], %s112
      %s115 = sshll.u32 [#allocation5], 4
      %s116 = int_to_ptr.vmem [resolvable:$true] %s115
      %118 = dma.vmem_to_hbm [thread:$0]  %s116, 16, %s2, [#allocation4]
    $region17: #{tpu_custom_call.1} parent=1 // pred_fallthru
      _
    // Predicated region
    $region18: #{tpu_custom_call.1} parent=1 // pred_check
      _
    $region19: #{tpu_custom_call.1} parent=1 // pred_check_branch
      %120 = sbr.rel (0) target = $region21
    $region20: #{tpu_custom_call.1} parent=1 // pred_region
      %121 = dma.done [#allocation4], 16
    $region21: #{tpu_custom_call.1} parent=1 // pred_fallthru
      _
    %122 = vsyncpa [#allocation3], 1
    %123 = vsyncpa [#allocation4], 1

</llo_original>
